<compile_context>
chip_gen: v7x
topology: tpu7x:2x2x1
jax: 0.10.0
libtpu: 0.0.40
codegen_flags: <defaults>
</compile_context>

<pallas_src>
import jax
import jax.numpy as jnp
from jax import lax
from jax.experimental import pallas as pl
from jax.experimental.pallas import tpu as pltpu


def _make_bilstm_kernel(T, B_blk, H, C):
    """Fused bidirectional LSTM kernel, closed over static sizes."""
    TWO_H = 2 * H

    def kernel(x_ref, wih_ref, whh_ref, b_ref, out_ref, gx_ref):
        # x_ref   : (T, B_blk, 2C) bf16   cols 0:C = x[t], cols C:2C = x[T-1-t]
        # wih_ref : (2C, 8H)       bf16   fused fwd/bwd input weights, gate-interleaved
        # whh_ref : (2H, 8H)       bf16   block-structured recurrent weights
        # b_ref   : (1, 8H)        f32    bias_ih + bias_hh, both directions
        # out_ref : (T, B_blk, 2H) f32    out[s] = [h_fwd(s) | h_bwd(T-1-s)]
        # gx_ref  : (T, B_blk, 8H) bf16   scratch: per-step merged input projections

        # ---- one fused input projection for all timesteps and both directions ----
        x2d = x_ref[...].reshape(T * B_blk, 2 * C)
        proj = jnp.dot(x2d, wih_ref[...], preferred_element_type=jnp.float32)
        proj = proj + b_ref[...]
        gx_ref[...] = proj.reshape(T, B_blk, 8 * H).astype(gx_ref.dtype)

        whh = whh_ref[...]                                  # bf16, hoisted out of the loop

        h0 = jnp.zeros((B_blk, TWO_H), jnp.float32)          # [h_fwd | h_bwd]
        c0 = jnp.zeros((B_blk, TWO_H), jnp.float32)

        def step(s, carry):
            h, c = carry
            gx = gx_ref[s].astype(jnp.float32)               # aligned (B_blk, 8H) load
            # one fused recurrent matmul for both directions (bf16 in, f32 acc)
            gates = gx + jnp.dot(h.astype(jnp.bfloat16), whh,
                                 preferred_element_type=jnp.float32)
            # gate columns: [i_f i_b | f_f f_b | o_f o_b | g_f g_b]
            # sigmoid(x) = 0.5*(tanh(0.5*x)+1): single tanh over the contiguous i|f|o slab
            sig = 0.5 * jnp.tanh(0.5 * gates[:, 0:6 * H]) + 0.5
            i = sig[:, 0:TWO_H]
            f = sig[:, TWO_H:2 * TWO_H]
            o = sig[:, 2 * TWO_H:3 * TWO_H]
            g = jnp.tanh(gates[:, 6 * H:8 * H])
            c_new = f * c + i * g
            h_new = o * jnp.tanh(c_new)
            out_ref[s] = h_new.astype(out_ref.dtype)         # lane/sublane-dense store
            return h_new, c_new

        # bounded unroll keeps LLO cross-iteration scheduling without vreg blow-up
        lax.fori_loop(0, T, step, (h0, c0), unroll=min(T, 8))

    return kernel


def pack_params(params):
    """Pre-pack PyTorch-layout LSTM weights into the fused kernel layout (done once)."""
    H = params["whh_f"].shape[1]          # torch weight_hh_l0: (4H, H)

    wih_f = params["wih_f"].T             # (C, 4H), cols in torch order [i f g o]
    wih_b = params["wih_b"].T
    whh_f = params["whh_f"].T             # (H, 4H)
    whh_b = params["whh_b"].T
    b_f = params["bih_f"] + params["bhh_f"]   # (4H,)
    b_b = params["bih_b"] + params["bhh_b"]

    def interleave(a_f, a_b):
        # torch gate order i,f,g,o -> kernel columns [i_f i_b f_f f_b o_f o_b g_f g_b]
        parts = []
        for k in (0, 1, 3, 2):            # i, f, o, g  (sigmoid gates first, tanh gate last)
            parts.append(a_f[..., k * H:(k + 1) * H])
            parts.append(a_b[..., k * H:(k + 1) * H])
        return jnp.concatenate(parts, axis=-1)

    zC = jnp.zeros_like(wih_f)
    wih = jnp.concatenate([interleave(wih_f, zC),    # rows 0:C   act on x[t]
                           interleave(zC, wih_b)],   # rows C:2C  act on x[T-1-t]
                          axis=0)                    # (2C, 8H)

    zH = jnp.zeros_like(whh_f)
    whh = jnp.concatenate([interleave(whh_f, zH),    # rows 0:H   act on h_fwd
                           interleave(zH, whh_b)],   # rows H:2H  act on h_bwd
                          axis=0)                    # (2H, 8H)

    return {
        "wih": wih.astype(jnp.bfloat16),
        "whh": whh.astype(jnp.bfloat16),
        "b": interleave(b_f, b_b)[None, :].astype(jnp.float32),
    }


@jax.jit
def lstm_module_forward(x, wih, whh, bias):
    """Full SSVEPNet.LSTM.forward: x (B, C, T) -> out (B, 2*T*C, H//C)."""
    b_sz, c, T = x.shape
    H = whh.shape[0] // 2

    # torch x.view(T, -1, c) is a raw row-major reinterpretation -> (T, b, c)
    x_tbc = jnp.reshape(x, (T, b_sz, c))

    # pad batch to a sublane multiple (8); rows are independent, padding is discarded
    B_pad = max(8, -(-b_sz // 8) * 8)
    if B_pad != b_sz:
        x_tbc = jnp.pad(x_tbc, ((0, 0), (0, B_pad - b_sz), (0, 0)))

    # fuse fwd input x[t] and bwd input x[T-1-t] into one 2C-wide row per step
    x_cat = jnp.concatenate([x_tbc, x_tbc[::-1]], axis=-1).astype(jnp.bfloat16)

    # batch-group grid ("parallel") so multi-TensorCore chips (v7x) can split the batch
    G = 2 if (B_pad >= 16 and B_pad % 16 == 0) else 1
    B_blk = B_pad // G

    kernel = _make_bilstm_kernel(T, B_blk, H, c)

    # size the VMEM scope to the actual resident set (double-buffer headroom, v7x-safe cap)
    resident = (2 * (T * B_blk * 2 * c * 2            # x block (bf16)
                     + 2 * c * 8 * H * 2              # wih (bf16)
                     + 2 * H * 8 * H * 2              # whh (bf16)
                     + 8 * H * 4                      # bias (f32)
                     + T * B_blk * 2 * H * 4)         # out block (f32)
                + T * B_blk * 8 * H * 2)              # gx scratch (bf16)
    vmem_limit = int(min(max(resident + (4 << 20), 32 << 20), 64 << 20))

    grid_spec = pltpu.PrefetchScalarGridSpec(
        num_scalar_prefetch=0,
        grid=(G,),
        in_specs=[
            pl.BlockSpec((T, B_blk, 2 * c), lambda g: (0, g, 0)),
            pl.BlockSpec((2 * c, 8 * H), lambda g: (0, 0)),
            pl.BlockSpec((2 * H, 8 * H), lambda g: (0, 0)),
            pl.BlockSpec((1, 8 * H), lambda g: (0, 0)),
        ],
        out_specs=pl.BlockSpec((T, B_blk, 2 * H), lambda g: (0, g, 0)),
        scratch_shapes=[pltpu.VMEM((T, B_blk, 8 * H), jnp.bfloat16)],
    )

    out_k = pl.pallas_call(
        kernel,
        out_shape=jax.ShapeDtypeStruct((T, B_pad, 2 * H), jnp.float32),
        grid_spec=grid_spec,
        compiler_params=pltpu.CompilerParams(
            dimension_semantics=("parallel",),
            vmem_limit_bytes=vmem_limit),
    )(x_cat, wih, whh, bias)

    # undo the backward-direction time reversal (cheap XLA reverse + concat)
    out_fwd = out_k[:, :b_sz, 0:H]                    # h_fwd(t)
    out_bwd = out_k[::-1, :b_sz, H:2 * H]             # h_bwd(t)
    r_out = jnp.concatenate([out_fwd, out_bwd], axis=-1)   # (T, b, 2H), torch layout
    return jnp.reshape(r_out, (b_sz, 2 * T * c, -1))


# ----------------------------- pure-JAX reference ----------------------------
def _lstm_ref(x_tbc, params):
    T, B, C = x_tbc.shape
    H = params["whh_f"].shape[1]

    def run(seq, wih, whh, bih, bhh):
        h = jnp.zeros((B, H), jnp.float32)
        c = jnp.zeros((B, H), jnp.float32)
        outs = []
        for t in range(seq.shape[0]):
            g = seq[t] @ wih.T + h @ whh.T + bih + bhh
            i = jax.nn.sigmoid(g[:, :H])
            f = jax.nn.sigmoid(g[:, H:2 * H])
            gg = jnp.tanh(g[:, 2 * H:3 * H])
            o = jax.nn.sigmoid(g[:, 3 * H:])
            c = f * c + i * gg
            h = o * jnp.tanh(c)
            outs.append(h)
        return jnp.stack(outs)

    h_fwd = run(x_tbc, params["wih_f"], params["whh_f"], params["bih_f"], params["bhh_f"])
    h_bwd = run(x_tbc[::-1], params["wih_b"], params["whh_b"],
                params["bih_b"], params["bhh_b"])[::-1]
    return jnp.concatenate([h_fwd, h_bwd], axis=-1)


def init_params(key, input_size, hidden_size):
    """Deterministic init mirroring nn.LSTM parameter shapes (uniform +-1/sqrt(H))."""
    H, C = hidden_size, input_size
    bound = 1.0 / (H ** 0.5)
    names_shapes = [
        ("wih_f", (4 * H, C)), ("whh_f", (4 * H, H)),
        ("bih_f", (4 * H,)), ("bhh_f", (4 * H,)),
        ("wih_b", (4 * H, C)), ("whh_b", (4 * H, H)),
        ("bih_b", (4 * H,)), ("bhh_b", (4 * H,)),
    ]
    params = {}
    for name, shape in names_shapes:
        key, sub = jax.random.split(key)
        params[name] = jax.random.uniform(sub, shape, jnp.float32, -bound, bound)
    return params


if __name__ == "__main__":
    B, C, T = 2, 16, 8          # x: (batch, channels, time)
    HIDDEN = 32                 # H must be a multiple of C for the final .view to be valid

    key = jax.random.PRNGKey(0)
    kx, kp = jax.random.split(key)
    x = jax.random.normal(kx, (B, C, T), dtype=jnp.float32)
    params = init_params(kp, input_size=C, hidden_size=HIDDEN)

    packed = pack_params(params)            # one-time host-side weight packing
    out = lstm_module_forward(x, packed["wih"], packed["whh"], packed["b"])
    out = jax.block_until_ready(out)

    # correctness check against an f32 pure-JAX reference (bf16 matmuls -> looser tol)
    x_tbc = jnp.reshape(x, (T, B, C))
    r_ref = _lstm_ref(x_tbc, params)
    expected = jnp.reshape(r_ref, (B, 2 * T * C, -1))

    assert out.shape == (B, 2 * T * C, HIDDEN // C), out.shape
    assert jnp.allclose(out, expected, rtol=2e-2, atol=2e-2), float(
        jnp.max(jnp.abs(out - expected)))

    print("KERNEL_OK")
</pallas_src>

<mosaic_0001>
module attributes {stable_mosaic.version = 11 : i64} {
  func.func @kernel(%arg0: i32, %arg1: memref<8x8x32xbf16, #tpu.memory_space<vmem>>, %arg2: memref<32x256xbf16, #tpu.memory_space<vmem>>, %arg3: memref<64x256xbf16, #tpu.memory_space<vmem>>, %arg4: memref<1x256xf32, #tpu.memory_space<vmem>>, %arg5: memref<8x8x64xf32, #tpu.memory_space<vmem>>, %arg6: memref<8x8x256xbf16, #tpu.memory_space<vmem>>) attributes {dimension_semantics = [#tpu.dimension_semantics<parallel>], iteration_bounds = array<i64: 1>, scalar_prefetch = 0 : i64, scratch_operands = 1 : i64, tpu.core_type = #tpu.core_type<tc>, window_params = [{transform_indices = @transform_0, window_bounds = array<i64: 8, 8, 32>}, {pipeline_mode = #tpu.pipeline_mode<synchronous>, transform_indices = @transform_1, window_bounds = array<i64: 32, 256>}, {pipeline_mode = #tpu.pipeline_mode<synchronous>, transform_indices = @transform_2, window_bounds = array<i64: 64, 256>}, {pipeline_mode = #tpu.pipeline_mode<synchronous>, transform_indices = @transform_3, window_bounds = array<i64: 1, 256>}, {transform_indices = @transform_4, window_bounds = array<i64: 8, 8, 64>}]} {
    %c0 = arith.constant 0 : index
    %c0_0 = arith.constant 0 : index
    %c0_1 = arith.constant 0 : index
    %0 = vector.load %arg1[%c0, %c0_0, %c0_1] : memref<8x8x32xbf16, #tpu.memory_space<vmem>>, vector<8x8x32xbf16>
    %1 = vector.shape_cast %0 : vector<8x8x32xbf16> to vector<64x32xbf16>
    %c0_2 = arith.constant 0 : index
    %c0_3 = arith.constant 0 : index
    %2 = vector.load %arg2[%c0_2, %c0_3] : memref<32x256xbf16, #tpu.memory_space<vmem>>, vector<32x256xbf16>
    %cst = arith.constant dense<0.000000e+00> : vector<64x256xf32>
    %3 = tpu.matmul %1, %2, %cst {dimension_numbers = #tpu.dot_dimension_numbers<[1], [0], [0], [1], [0, 0, 1, 1], [], []>} : vector<64x32xbf16>, vector<32x256xbf16>, vector<64x256xf32> -> vector<64x256xf32>
    %c0_4 = arith.constant 0 : index
    %c0_5 = arith.constant 0 : index
    %4 = vector.load %arg4[%c0_4, %c0_5] : memref<1x256xf32, #tpu.memory_space<vmem>>, vector<1x256xf32>
    %5 = vector.broadcast %4 : vector<1x256xf32> to vector<64x256xf32>
    %6 = arith.addf %3, %5 : vector<64x256xf32>
    %7 = vector.shape_cast %6 : vector<64x256xf32> to vector<8x8x256xf32>
    %8 = arith.truncf %7 : vector<8x8x256xf32> to vector<8x8x256xbf16>
    %c0_6 = arith.constant 0 : index
    %c0_7 = arith.constant 0 : index
    %c0_8 = arith.constant 0 : index
    %9 = vector.load %arg6[%c0_6, %c0_7, %c0_8] : memref<8x8x256xbf16, #tpu.memory_space<vmem>>, vector<8x8x256xbf16>
    tpu.vector_store %arg6[%c0_6, %c0_7, %c0_8], %8 {strides = array<i32>} : memref<8x8x256xbf16, #tpu.memory_space<vmem>>, vector<8x8x256xbf16>,
    %c0_9 = arith.constant 0 : index
    %c0_10 = arith.constant 0 : index
    %10 = vector.load %arg3[%c0_9, %c0_10] : memref<64x256xbf16, #tpu.memory_space<vmem>>, vector<64x256xbf16>
    %cst_11 = arith.constant 0.000000e+00 : f32
    %11 = vector.broadcast %cst_11 : f32 to vector<8x64xf32>
    %cst_12 = arith.constant 0.000000e+00 : f32
    %12 = vector.broadcast %cst_12 : f32 to vector<8x64xf32>
    %c0_i32 = arith.constant 0 : i32
    %13 = arith.index_cast %c0_i32 : i32 to index
    %c0_13 = arith.constant 0 : index
    %c0_14 = arith.constant 0 : index
    %14 = vector.load %arg6[%13, %c0_13, %c0_14] : memref<8x8x256xbf16, #tpu.memory_space<vmem>>, vector<1x8x256xbf16>
    %15 = vector.shape_cast %14 : vector<1x8x256xbf16> to vector<8x256xbf16>
    %16 = arith.extf %15 : vector<8x256xbf16> to vector<8x256xf32>
    %17 = arith.truncf %11 : vector<8x64xf32> to vector<8x64xbf16>
    %cst_15 = arith.constant dense<0.000000e+00> : vector<8x256xf32>
    %18 = tpu.matmul %17, %10, %cst_15 {dimension_numbers = #tpu.dot_dimension_numbers<[1], [0], [0], [1], [0, 0, 1, 1], [], []>} : vector<8x64xbf16>, vector<64x256xbf16>, vector<8x256xf32> -> vector<8x256xf32>
    %19 = arith.addf %16, %18 : vector<8x256xf32>
    %20 = vector.extract_strided_slice %19 {offsets = [0, 0], sizes = [8, 192], strides = [1, 1]} : vector<8x256xf32> to vector<8x192xf32>
    %cst_16 = arith.constant 5.000000e-01 : f32
    %21 = vector.broadcast %cst_16 : f32 to vector<8x192xf32>
    %22 = arith.mulf %21, %20 : vector<8x192xf32>
    %23 = math.tanh %22 : vector<8x192xf32>
    %cst_17 = arith.constant 5.000000e-01 : f32
    %24 = vector.broadcast %cst_17 : f32 to vector<8x192xf32>
    %25 = arith.mulf %24, %23 : vector<8x192xf32>
    %cst_18 = arith.constant 5.000000e-01 : f32
    %26 = vector.broadcast %cst_18 : f32 to vector<8x192xf32>
    %27 = arith.addf %25, %26 : vector<8x192xf32>
    %28 = vector.extract_strided_slice %27 {offsets = [0, 0], sizes = [8, 64], strides = [1, 1]} : vector<8x192xf32> to vector<8x64xf32>
    %29 = vector.extract_strided_slice %27 {offsets = [0, 64], sizes = [8, 64], strides = [1, 1]} : vector<8x192xf32> to vector<8x64xf32>
    %30 = vector.extract_strided_slice %27 {offsets = [0, 128], sizes = [8, 64], strides = [1, 1]} : vector<8x192xf32> to vector<8x64xf32>
    %31 = vector.extract_strided_slice %19 {offsets = [0, 192], sizes = [8, 64], strides = [1, 1]} : vector<8x256xf32> to vector<8x64xf32>
    %32 = math.tanh %31 : vector<8x64xf32>
    %33 = arith.mulf %29, %12 : vector<8x64xf32>
    %34 = arith.mulf %28, %32 : vector<8x64xf32>
    %35 = arith.addf %33, %34 : vector<8x64xf32>
    %36 = math.tanh %35 : vector<8x64xf32>
    %37 = arith.mulf %30, %36 : vector<8x64xf32>
    %38 = arith.index_cast %c0_i32 : i32 to index
    %c0_19 = arith.constant 0 : index
    %c0_20 = arith.constant 0 : index
    %39 = vector.load %arg5[%38, %c0_19, %c0_20] : memref<8x8x64xf32, #tpu.memory_space<vmem>>, vector<1x8x64xf32>
    %40 = vector.shape_cast %39 : vector<1x8x64xf32> to vector<8x64xf32>
    %41 = vector.shape_cast %37 : vector<8x64xf32> to vector<1x8x64xf32>
    tpu.vector_store %arg5[%38, %c0_19, %c0_20], %41 {strides = array<i32>} : memref<8x8x64xf32, #tpu.memory_space<vmem>>, vector<1x8x64xf32>,
    %c1_i32 = arith.constant 1 : i32
    %42 = arith.index_cast %c1_i32 : i32 to index
    %c0_21 = arith.constant 0 : index
    %c0_22 = arith.constant 0 : index
    %43 = vector.load %arg6[%42, %c0_21, %c0_22] : memref<8x8x256xbf16, #tpu.memory_space<vmem>>, vector<1x8x256xbf16>
    %44 = vector.shape_cast %43 : vector<1x8x256xbf16> to vector<8x256xbf16>
    %45 = arith.extf %44 : vector<8x256xbf16> to vector<8x256xf32>
    %46 = arith.truncf %37 : vector<8x64xf32> to vector<8x64xbf16>
    %cst_23 = arith.constant dense<0.000000e+00> : vector<8x256xf32>
    %47 = tpu.matmul %46, %10, %cst_23 {dimension_numbers = #tpu.dot_dimension_numbers<[1], [0], [0], [1], [0, 0, 1, 1], [], []>} : vector<8x64xbf16>, vector<64x256xbf16>, vector<8x256xf32> -> vector<8x256xf32>
    %48 = arith.addf %45, %47 : vector<8x256xf32>
    %49 = vector.extract_strided_slice %48 {offsets = [0, 0], sizes = [8, 192], strides = [1, 1]} : vector<8x256xf32> to vector<8x192xf32>
    %cst_24 = arith.constant 5.000000e-01 : f32
    %50 = vector.broadcast %cst_24 : f32 to vector<8x192xf32>
    %51 = arith.mulf %50, %49 : vector<8x192xf32>
    %52 = math.tanh %51 : vector<8x192xf32>
    %cst_25 = arith.constant 5.000000e-01 : f32
    %53 = vector.broadcast %cst_25 : f32 to vector<8x192xf32>
    %54 = arith.mulf %53, %52 : vector<8x192xf32>
    %cst_26 = arith.constant 5.000000e-01 : f32
    %55 = vector.broadcast %cst_26 : f32 to vector<8x192xf32>
    %56 = arith.addf %54, %55 : vector<8x192xf32>
    %57 = vector.extract_strided_slice %56 {offsets = [0, 0], sizes = [8, 64], strides = [1, 1]} : vector<8x192xf32> to vector<8x64xf32>
    %58 = vector.extract_strided_slice %56 {offsets = [0, 64], sizes = [8, 64], strides = [1, 1]} : vector<8x192xf32> to vector<8x64xf32>
    %59 = vector.extract_strided_slice %56 {offsets = [0, 128], sizes = [8, 64], strides = [1, 1]} : vector<8x192xf32> to vector<8x64xf32>
    %60 = vector.extract_strided_slice %48 {offsets = [0, 192], sizes = [8, 64], strides = [1, 1]} : vector<8x256xf32> to vector<8x64xf32>
    %61 = math.tanh %60 : vector<8x64xf32>
    %62 = arith.mulf %58, %35 : vector<8x64xf32>
    %63 = arith.mulf %57, %61 : vector<8x64xf32>
    %64 = arith.addf %62, %63 : vector<8x64xf32>
    %65 = math.tanh %64 : vector<8x64xf32>
    %66 = arith.mulf %59, %65 : vector<8x64xf32>
    %67 = arith.index_cast %c1_i32 : i32 to index
    %c0_27 = arith.constant 0 : index
    %c0_28 = arith.constant 0 : index
    %68 = vector.load %arg5[%67, %c0_27, %c0_28] : memref<8x8x64xf32, #tpu.memory_space<vmem>>, vector<1x8x64xf32>
    %69 = vector.shape_cast %68 : vector<1x8x64xf32> to vector<8x64xf32>
    %70 = vector.shape_cast %66 : vector<8x64xf32> to vector<1x8x64xf32>
    tpu.vector_store %arg5[%67, %c0_27, %c0_28], %70 {strides = array<i32>} : memref<8x8x64xf32, #tpu.memory_space<vmem>>, vector<1x8x64xf32>,
    %c2_i32 = arith.constant 2 : i32
    %71 = arith.index_cast %c2_i32 : i32 to index
    %c0_29 = arith.constant 0 : index
    %c0_30 = arith.constant 0 : index
    %72 = vector.load %arg6[%71, %c0_29, %c0_30] : memref<8x8x256xbf16, #tpu.memory_space<vmem>>, vector<1x8x256xbf16>
    %73 = vector.shape_cast %72 : vector<1x8x256xbf16> to vector<8x256xbf16>
    %74 = arith.extf %73 : vector<8x256xbf16> to vector<8x256xf32>
    %75 = arith.truncf %66 : vector<8x64xf32> to vector<8x64xbf16>
    %cst_31 = arith.constant dense<0.000000e+00> : vector<8x256xf32>
    %76 = tpu.matmul %75, %10, %cst_31 {dimension_numbers = #tpu.dot_dimension_numbers<[1], [0], [0], [1], [0, 0, 1, 1], [], []>} : vector<8x64xbf16>, vector<64x256xbf16>, vector<8x256xf32> -> vector<8x256xf32>
    %77 = arith.addf %74, %76 : vector<8x256xf32>
    %78 = vector.extract_strided_slice %77 {offsets = [0, 0], sizes = [8, 192], strides = [1, 1]} : vector<8x256xf32> to vector<8x192xf32>
    %cst_32 = arith.constant 5.000000e-01 : f32
    %79 = vector.broadcast %cst_32 : f32 to vector<8x192xf32>
    %80 = arith.mulf %79, %78 : vector<8x192xf32>
    %81 = math.tanh %80 : vector<8x192xf32>
    %cst_33 = arith.constant 5.000000e-01 : f32
    %82 = vector.broadcast %cst_33 : f32 to vector<8x192xf32>
    %83 = arith.mulf %82, %81 : vector<8x192xf32>
    %cst_34 = arith.constant 5.000000e-01 : f32
    %84 = vector.broadcast %cst_34 : f32 to vector<8x192xf32>
    %85 = arith.addf %83, %84 : vector<8x192xf32>
    %86 = vector.extract_strided_slice %85 {offsets = [0, 0], sizes = [8, 64], strides = [1, 1]} : vector<8x192xf32> to vector<8x64xf32>
    %87 = vector.extract_strided_slice %85 {offsets = [0, 64], sizes = [8, 64], strides = [1, 1]} : vector<8x192xf32> to vector<8x64xf32>
    %88 = vector.extract_strided_slice %85 {offsets = [0, 128], sizes = [8, 64], strides = [1, 1]} : vector<8x192xf32> to vector<8x64xf32>
    %89 = vector.extract_strided_slice %77 {offsets = [0, 192], sizes = [8, 64], strides = [1, 1]} : vector<8x256xf32> to vector<8x64xf32>
    %90 = math.tanh %89 : vector<8x64xf32>
    %91 = arith.mulf %87, %64 : vector<8x64xf32>
    %92 = arith.mulf %86, %90 : vector<8x64xf32>
    %93 = arith.addf %91, %92 : vector<8x64xf32>
    %94 = math.tanh %93 : vector<8x64xf32>
    %95 = arith.mulf %88, %94 : vector<8x64xf32>
    %96 = arith.index_cast %c2_i32 : i32 to index
    %c0_35 = arith.constant 0 : index
    %c0_36 = arith.constant 0 : index
    %97 = vector.load %arg5[%96, %c0_35, %c0_36] : memref<8x8x64xf32, #tpu.memory_space<vmem>>, vector<1x8x64xf32>
    %98 = vector.shape_cast %97 : vector<1x8x64xf32> to vector<8x64xf32>
    %99 = vector.shape_cast %95 : vector<8x64xf32> to vector<1x8x64xf32>
    tpu.vector_store %arg5[%96, %c0_35, %c0_36], %99 {strides = array<i32>} : memref<8x8x64xf32, #tpu.memory_space<vmem>>, vector<1x8x64xf32>,
    %c3_i32 = arith.constant 3 : i32
    %100 = arith.index_cast %c3_i32 : i32 to index
    %c0_37 = arith.constant 0 : index
    %c0_38 = arith.constant 0 : index
    %101 = vector.load %arg6[%100, %c0_37, %c0_38] : memref<8x8x256xbf16, #tpu.memory_space<vmem>>, vector<1x8x256xbf16>
    %102 = vector.shape_cast %101 : vector<1x8x256xbf16> to vector<8x256xbf16>
    %103 = arith.extf %102 : vector<8x256xbf16> to vector<8x256xf32>
    %104 = arith.truncf %95 : vector<8x64xf32> to vector<8x64xbf16>
    %cst_39 = arith.constant dense<0.000000e+00> : vector<8x256xf32>
    %105 = tpu.matmul %104, %10, %cst_39 {dimension_numbers = #tpu.dot_dimension_numbers<[1], [0], [0], [1], [0, 0, 1, 1], [], []>} : vector<8x64xbf16>, vector<64x256xbf16>, vector<8x256xf32> -> vector<8x256xf32>
    %106 = arith.addf %103, %105 : vector<8x256xf32>
    %107 = vector.extract_strided_slice %106 {offsets = [0, 0], sizes = [8, 192], strides = [1, 1]} : vector<8x256xf32> to vector<8x192xf32>
    %cst_40 = arith.constant 5.000000e-01 : f32
    %108 = vector.broadcast %cst_40 : f32 to vector<8x192xf32>
    %109 = arith.mulf %108, %107 : vector<8x192xf32>
    %110 = math.tanh %109 : vector<8x192xf32>
    %cst_41 = arith.constant 5.000000e-01 : f32
    %111 = vector.broadcast %cst_41 : f32 to vector<8x192xf32>
    %112 = arith.mulf %111, %110 : vector<8x192xf32>
    %cst_42 = arith.constant 5.000000e-01 : f32
    %113 = vector.broadcast %cst_42 : f32 to vector<8x192xf32>
    %114 = arith.addf %112, %113 : vector<8x192xf32>
    %115 = vector.extract_strided_slice %114 {offsets = [0, 0], sizes = [8, 64], strides = [1, 1]} : vector<8x192xf32> to vector<8x64xf32>
    %116 = vector.extract_strided_slice %114 {offsets = [0, 64], sizes = [8, 64], strides = [1, 1]} : vector<8x192xf32> to vector<8x64xf32>
    %117 = vector.extract_strided_slice %114 {offsets = [0, 128], sizes = [8, 64], strides = [1, 1]} : vector<8x192xf32> to vector<8x64xf32>
    %118 = vector.extract_strided_slice %106 {offsets = [0, 192], sizes = [8, 64], strides = [1, 1]} : vector<8x256xf32> to vector<8x64xf32>
    %119 = math.tanh %118 : vector<8x64xf32>
    %120 = arith.mulf %116, %93 : vector<8x64xf32>
    %121 = arith.mulf %115, %119 : vector<8x64xf32>
    %122 = arith.addf %120, %121 : vector<8x64xf32>
    %123 = math.tanh %122 : vector<8x64xf32>
    %124 = arith.mulf %117, %123 : vector<8x64xf32>
    %125 = arith.index_cast %c3_i32 : i32 to index
    %c0_43 = arith.constant 0 : index
    %c0_44 = arith.constant 0 : index
    %126 = vector.load %arg5[%125, %c0_43, %c0_44] : memref<8x8x64xf32, #tpu.memory_space<vmem>>, vector<1x8x64xf32>
    %127 = vector.shape_cast %126 : vector<1x8x64xf32> to vector<8x64xf32>
    %128 = vector.shape_cast %124 : vector<8x64xf32> to vector<1x8x64xf32>
    tpu.vector_store %arg5[%125, %c0_43, %c0_44], %128 {strides = array<i32>} : memref<8x8x64xf32, #tpu.memory_space<vmem>>, vector<1x8x64xf32>,
    %c4_i32 = arith.constant 4 : i32
    %129 = arith.index_cast %c4_i32 : i32 to index
    %c0_45 = arith.constant 0 : index
    %c0_46 = arith.constant 0 : index
    %130 = vector.load %arg6[%129, %c0_45, %c0_46] : memref<8x8x256xbf16, #tpu.memory_space<vmem>>, vector<1x8x256xbf16>
    %131 = vector.shape_cast %130 : vector<1x8x256xbf16> to vector<8x256xbf16>
    %132 = arith.extf %131 : vector<8x256xbf16> to vector<8x256xf32>
    %133 = arith.truncf %124 : vector<8x64xf32> to vector<8x64xbf16>
    %cst_47 = arith.constant dense<0.000000e+00> : vector<8x256xf32>
    %134 = tpu.matmul %133, %10, %cst_47 {dimension_numbers = #tpu.dot_dimension_numbers<[1], [0], [0], [1], [0, 0, 1, 1], [], []>} : vector<8x64xbf16>, vector<64x256xbf16>, vector<8x256xf32> -> vector<8x256xf32>
    %135 = arith.addf %132, %134 : vector<8x256xf32>
    %136 = vector.extract_strided_slice %135 {offsets = [0, 0], sizes = [8, 192], strides = [1, 1]} : vector<8x256xf32> to vector<8x192xf32>
    %cst_48 = arith.constant 5.000000e-01 : f32
    %137 = vector.broadcast %cst_48 : f32 to vector<8x192xf32>
    %138 = arith.mulf %137, %136 : vector<8x192xf32>
    %139 = math.tanh %138 : vector<8x192xf32>
    %cst_49 = arith.constant 5.000000e-01 : f32
    %140 = vector.broadcast %cst_49 : f32 to vector<8x192xf32>
    %141 = arith.mulf %140, %139 : vector<8x192xf32>
    %cst_50 = arith.constant 5.000000e-01 : f32
    %142 = vector.broadcast %cst_50 : f32 to vector<8x192xf32>
    %143 = arith.addf %141, %142 : vector<8x192xf32>
    %144 = vector.extract_strided_slice %143 {offsets = [0, 0], sizes = [8, 64], strides = [1, 1]} : vector<8x192xf32> to vector<8x64xf32>
    %145 = vector.extract_strided_slice %143 {offsets = [0, 64], sizes = [8, 64], strides = [1, 1]} : vector<8x192xf32> to vector<8x64xf32>
    %146 = vector.extract_strided_slice %143 {offsets = [0, 128], sizes = [8, 64], strides = [1, 1]} : vector<8x192xf32> to vector<8x64xf32>
    %147 = vector.extract_strided_slice %135 {offsets = [0, 192], sizes = [8, 64], strides = [1, 1]} : vector<8x256xf32> to vector<8x64xf32>
    %148 = math.tanh %147 : vector<8x64xf32>
    %149 = arith.mulf %145, %122 : vector<8x64xf32>
    %150 = arith.mulf %144, %148 : vector<8x64xf32>
    %151 = arith.addf %149, %150 : vector<8x64xf32>
    %152 = math.tanh %151 : vector<8x64xf32>
    %153 = arith.mulf %146, %152 : vector<8x64xf32>
    %154 = arith.index_cast %c4_i32 : i32 to index
    %c0_51 = arith.constant 0 : index
    %c0_52 = arith.constant 0 : index
    %155 = vector.load %arg5[%154, %c0_51, %c0_52] : memref<8x8x64xf32, #tpu.memory_space<vmem>>, vector<1x8x64xf32>
    %156 = vector.shape_cast %155 : vector<1x8x64xf32> to vector<8x64xf32>
    %157 = vector.shape_cast %153 : vector<8x64xf32> to vector<1x8x64xf32>
    tpu.vector_store %arg5[%154, %c0_51, %c0_52], %157 {strides = array<i32>} : memref<8x8x64xf32, #tpu.memory_space<vmem>>, vector<1x8x64xf32>,
    %c5_i32 = arith.constant 5 : i32
    %158 = arith.index_cast %c5_i32 : i32 to index
    %c0_53 = arith.constant 0 : index
    %c0_54 = arith.constant 0 : index
    %159 = vector.load %arg6[%158, %c0_53, %c0_54] : memref<8x8x256xbf16, #tpu.memory_space<vmem>>, vector<1x8x256xbf16>
    %160 = vector.shape_cast %159 : vector<1x8x256xbf16> to vector<8x256xbf16>
    %161 = arith.extf %160 : vector<8x256xbf16> to vector<8x256xf32>
    %162 = arith.truncf %153 : vector<8x64xf32> to vector<8x64xbf16>
    %cst_55 = arith.constant dense<0.000000e+00> : vector<8x256xf32>
    %163 = tpu.matmul %162, %10, %cst_55 {dimension_numbers = #tpu.dot_dimension_numbers<[1], [0], [0], [1], [0, 0, 1, 1], [], []>} : vector<8x64xbf16>, vector<64x256xbf16>, vector<8x256xf32> -> vector<8x256xf32>
    %164 = arith.addf %161, %163 : vector<8x256xf32>
    %165 = vector.extract_strided_slice %164 {offsets = [0, 0], sizes = [8, 192], strides = [1, 1]} : vector<8x256xf32> to vector<8x192xf32>
    %cst_56 = arith.constant 5.000000e-01 : f32
    %166 = vector.broadcast %cst_56 : f32 to vector<8x192xf32>
    %167 = arith.mulf %166, %165 : vector<8x192xf32>
    %168 = math.tanh %167 : vector<8x192xf32>
    %cst_57 = arith.constant 5.000000e-01 : f32
    %169 = vector.broadcast %cst_57 : f32 to vector<8x192xf32>
    %170 = arith.mulf %169, %168 : vector<8x192xf32>
    %cst_58 = arith.constant 5.000000e-01 : f32
    %171 = vector.broadcast %cst_58 : f32 to vector<8x192xf32>
    %172 = arith.addf %170, %171 : vector<8x192xf32>
    %173 = vector.extract_strided_slice %172 {offsets = [0, 0], sizes = [8, 64], strides = [1, 1]} : vector<8x192xf32> to vector<8x64xf32>
    %174 = vector.extract_strided_slice %172 {offsets = [0, 64], sizes = [8, 64], strides = [1, 1]} : vector<8x192xf32> to vector<8x64xf32>
    %175 = vector.extract_strided_slice %172 {offsets = [0, 128], sizes = [8, 64], strides = [1, 1]} : vector<8x192xf32> to vector<8x64xf32>
    %176 = vector.extract_strided_slice %164 {offsets = [0, 192], sizes = [8, 64], strides = [1, 1]} : vector<8x256xf32> to vector<8x64xf32>
    %177 = math.tanh %176 : vector<8x64xf32>
    %178 = arith.mulf %174, %151 : vector<8x64xf32>
    %179 = arith.mulf %173, %177 : vector<8x64xf32>
    %180 = arith.addf %178, %179 : vector<8x64xf32>
    %181 = math.tanh %180 : vector<8x64xf32>
    %182 = arith.mulf %175, %181 : vector<8x64xf32>
    %183 = arith.index_cast %c5_i32 : i32 to index
    %c0_59 = arith.constant 0 : index
    %c0_60 = arith.constant 0 : index
    %184 = vector.load %arg5[%183, %c0_59, %c0_60] : memref<8x8x64xf32, #tpu.memory_space<vmem>>, vector<1x8x64xf32>
    %185 = vector.shape_cast %184 : vector<1x8x64xf32> to vector<8x64xf32>
    %186 = vector.shape_cast %182 : vector<8x64xf32> to vector<1x8x64xf32>
    tpu.vector_store %arg5[%183, %c0_59, %c0_60], %186 {strides = array<i32>} : memref<8x8x64xf32, #tpu.memory_space<vmem>>, vector<1x8x64xf32>,
    %c6_i32 = arith.constant 6 : i32
    %187 = arith.index_cast %c6_i32 : i32 to index
    %c0_61 = arith.constant 0 : index
    %c0_62 = arith.constant 0 : index
    %188 = vector.load %arg6[%187, %c0_61, %c0_62] : memref<8x8x256xbf16, #tpu.memory_space<vmem>>, vector<1x8x256xbf16>
    %189 = vector.shape_cast %188 : vector<1x8x256xbf16> to vector<8x256xbf16>
    %190 = arith.extf %189 : vector<8x256xbf16> to vector<8x256xf32>
    %191 = arith.truncf %182 : vector<8x64xf32> to vector<8x64xbf16>
    %cst_63 = arith.constant dense<0.000000e+00> : vector<8x256xf32>
    %192 = tpu.matmul %191, %10, %cst_63 {dimension_numbers = #tpu.dot_dimension_numbers<[1], [0], [0], [1], [0, 0, 1, 1], [], []>} : vector<8x64xbf16>, vector<64x256xbf16>, vector<8x256xf32> -> vector<8x256xf32>
    %193 = arith.addf %190, %192 : vector<8x256xf32>
    %194 = vector.extract_strided_slice %193 {offsets = [0, 0], sizes = [8, 192], strides = [1, 1]} : vector<8x256xf32> to vector<8x192xf32>
    %cst_64 = arith.constant 5.000000e-01 : f32
    %195 = vector.broadcast %cst_64 : f32 to vector<8x192xf32>
    %196 = arith.mulf %195, %194 : vector<8x192xf32>
    %197 = math.tanh %196 : vector<8x192xf32>
    %cst_65 = arith.constant 5.000000e-01 : f32
    %198 = vector.broadcast %cst_65 : f32 to vector<8x192xf32>
    %199 = arith.mulf %198, %197 : vector<8x192xf32>
    %cst_66 = arith.constant 5.000000e-01 : f32
    %200 = vector.broadcast %cst_66 : f32 to vector<8x192xf32>
    %201 = arith.addf %199, %200 : vector<8x192xf32>
    %202 = vector.extract_strided_slice %201 {offsets = [0, 0], sizes = [8, 64], strides = [1, 1]} : vector<8x192xf32> to vector<8x64xf32>
    %203 = vector.extract_strided_slice %201 {offsets = [0, 64], sizes = [8, 64], strides = [1, 1]} : vector<8x192xf32> to vector<8x64xf32>
    %204 = vector.extract_strided_slice %201 {offsets = [0, 128], sizes = [8, 64], strides = [1, 1]} : vector<8x192xf32> to vector<8x64xf32>
    %205 = vector.extract_strided_slice %193 {offsets = [0, 192], sizes = [8, 64], strides = [1, 1]} : vector<8x256xf32> to vector<8x64xf32>
    %206 = math.tanh %205 : vector<8x64xf32>
    %207 = arith.mulf %203, %180 : vector<8x64xf32>
    %208 = arith.mulf %202, %206 : vector<8x64xf32>
    %209 = arith.addf %207, %208 : vector<8x64xf32>
    %210 = math.tanh %209 : vector<8x64xf32>
    %211 = arith.mulf %204, %210 : vector<8x64xf32>
    %212 = arith.index_cast %c6_i32 : i32 to index
    %c0_67 = arith.constant 0 : index
    %c0_68 = arith.constant 0 : index
    %213 = vector.load %arg5[%212, %c0_67, %c0_68] : memref<8x8x64xf32, #tpu.memory_space<vmem>>, vector<1x8x64xf32>
    %214 = vector.shape_cast %213 : vector<1x8x64xf32> to vector<8x64xf32>
    %215 = vector.shape_cast %211 : vector<8x64xf32> to vector<1x8x64xf32>
    tpu.vector_store %arg5[%212, %c0_67, %c0_68], %215 {strides = array<i32>} : memref<8x8x64xf32, #tpu.memory_space<vmem>>, vector<1x8x64xf32>,
    %c7_i32 = arith.constant 7 : i32
    %216 = arith.index_cast %c7_i32 : i32 to index
    %c0_69 = arith.constant 0 : index
    %c0_70 = arith.constant 0 : index
    %217 = vector.load %arg6[%216, %c0_69, %c0_70] : memref<8x8x256xbf16, #tpu.memory_space<vmem>>, vector<1x8x256xbf16>
    %218 = vector.shape_cast %217 : vector<1x8x256xbf16> to vector<8x256xbf16>
    %219 = arith.extf %218 : vector<8x256xbf16> to vector<8x256xf32>
    %220 = arith.truncf %211 : vector<8x64xf32> to vector<8x64xbf16>
    %cst_71 = arith.constant dense<0.000000e+00> : vector<8x256xf32>
    %221 = tpu.matmul %220, %10, %cst_71 {dimension_numbers = #tpu.dot_dimension_numbers<[1], [0], [0], [1], [0, 0, 1, 1], [], []>} : vector<8x64xbf16>, vector<64x256xbf16>, vector<8x256xf32> -> vector<8x256xf32>
    %222 = arith.addf %219, %221 : vector<8x256xf32>
    %223 = vector.extract_strided_slice %222 {offsets = [0, 0], sizes = [8, 192], strides = [1, 1]} : vector<8x256xf32> to vector<8x192xf32>
    %cst_72 = arith.constant 5.000000e-01 : f32
    %224 = vector.broadcast %cst_72 : f32 to vector<8x192xf32>
    %225 = arith.mulf %224, %223 : vector<8x192xf32>
    %226 = math.tanh %225 : vector<8x192xf32>
    %cst_73 = arith.constant 5.000000e-01 : f32
    %227 = vector.broadcast %cst_73 : f32 to vector<8x192xf32>
    %228 = arith.mulf %227, %226 : vector<8x192xf32>
    %cst_74 = arith.constant 5.000000e-01 : f32
    %229 = vector.broadcast %cst_74 : f32 to vector<8x192xf32>
    %230 = arith.addf %228, %229 : vector<8x192xf32>
    %231 = vector.extract_strided_slice %230 {offsets = [0, 0], sizes = [8, 64], strides = [1, 1]} : vector<8x192xf32> to vector<8x64xf32>
    %232 = vector.extract_strided_slice %230 {offsets = [0, 64], sizes = [8, 64], strides = [1, 1]} : vector<8x192xf32> to vector<8x64xf32>
    %233 = vector.extract_strided_slice %230 {offsets = [0, 128], sizes = [8, 64], strides = [1, 1]} : vector<8x192xf32> to vector<8x64xf32>
    %234 = vector.extract_strided_slice %222 {offsets = [0, 192], sizes = [8, 64], strides = [1, 1]} : vector<8x256xf32> to vector<8x64xf32>
    %235 = math.tanh %234 : vector<8x64xf32>
    %236 = arith.mulf %232, %209 : vector<8x64xf32>
    %237 = arith.mulf %231, %235 : vector<8x64xf32>
    %238 = arith.addf %236, %237 : vector<8x64xf32>
    %239 = math.tanh %238 : vector<8x64xf32>
    %240 = arith.mulf %233, %239 : vector<8x64xf32>
    %241 = arith.index_cast %c7_i32 : i32 to index
    %c0_75 = arith.constant 0 : index
    %c0_76 = arith.constant 0 : index
    %242 = vector.load %arg5[%241, %c0_75, %c0_76] : memref<8x8x64xf32, #tpu.memory_space<vmem>>, vector<1x8x64xf32>
    %243 = vector.shape_cast %242 : vector<1x8x64xf32> to vector<8x64xf32>
    %244 = vector.shape_cast %240 : vector<8x64xf32> to vector<1x8x64xf32>
    tpu.vector_store %arg5[%241, %c0_75, %c0_76], %244 {strides = array<i32>} : memref<8x8x64xf32, #tpu.memory_space<vmem>>, vector<1x8x64xf32>,
    %c8_i32 = arith.constant 8 : i32
    return
  }
  func.func @transform_0(%arg0: i32) -> (i32, i32, i32) {
    %c0_i32 = arith.constant 0 : i32
    %c0_i32_0 = arith.constant 0 : i32
    %c0_i32_1 = arith.constant 0 : i32
    return %c0_i32, %arg0, %c0_i32_0 : i32, i32, i32
  }
  func.func @transform_1(%arg0: i32) -> (i32, i32) {
    %c0_i32 = arith.constant 0 : i32
    %c0_i32_0 = arith.constant 0 : i32
    %c0_i32_1 = arith.constant 0 : i32
    return %c0_i32, %c0_i32_0 : i32, i32
  }
  func.func @transform_2(%arg0: i32) -> (i32, i32) {
    %c0_i32 = arith.constant 0 : i32
    %c0_i32_0 = arith.constant 0 : i32
    %c0_i32_1 = arith.constant 0 : i32
    return %c0_i32, %c0_i32_0 : i32, i32
  }
  func.func @transform_3(%arg0: i32) -> (i32, i32) {
    %c0_i32 = arith.constant 0 : i32
    %c0_i32_0 = arith.constant 0 : i32
    %c0_i32_1 = arith.constant 0 : i32
    return %c0_i32, %c0_i32_0 : i32, i32
  }
  func.func @transform_4(%arg0: i32) -> (i32, i32, i32) {
    %c0_i32 = arith.constant 0 : i32
    %c0_i32_0 = arith.constant 0 : i32
    %c0_i32_1 = arith.constant 0 : i32
    return %c0_i32, %arg0, %c0_i32_0 : i32, i32, i32
  }
}

</mosaic_0001>

<llo_original>
// kernel: lstm_module_forward.1
$region0: #{lstm_module_forward.1}
  #allocation0 [shape = 'u32[]', space=smem, size = 0x4, offset = 0x4, fixed_abs, tag = 'smem constant byte address 0x4 - core index']
  #allocation1 [shape = 'u32[144,128]{1,0:T(1,128)}', space=vmem, size = 0x12000, scoped, tag = 'internal scratch']
  #allocation2 [shape = 'bf16[8,8,256]{2,1,0:T(8,128)(2,1)}', space=vmem, size = 0x8000, scoped, tag = 'scratch operand']
  %s0 = inlined_call_operand.vmem [shape: bf16[8,8,32], index: 0, kind: input, shape index: {}]
  %s1 = inlined_call_operand.vmem [shape: bf16[32,256], index: 1, kind: input, shape index: {}]
  %s2 = inlined_call_operand.vmem [shape: bf16[64,256], index: 2, kind: input, shape index: {}]
  %s3 = inlined_call_operand.vmem [shape: f32[1,256], index: 3, kind: input, shape index: {}]
  %s4 = inlined_call_operand.vmem [shape: f32[8,8,64], index: 4, kind: output, shape index: {}]
  %s5 = sld [smem:[#allocation0]]
  $region26: #{lstm_module_forward.1} parent=0
    _
  %s7 = ssub.s32 1, %s5
  %s8 = scalar_select 0, %s7, %s5
  // Predicated region
  $region2: #{lstm_module_forward.1} parent=0 // pred_check
    _
  $region3: #{lstm_module_forward.1} parent=0 // pred_check_branch
    %10 = sbr.rel (0) target = $region5
  $region4: #{lstm_module_forward.1} parent=0 // pred_region
    _
  $region5: #{lstm_module_forward.1} parent=0 // pred_fallthru
    _
  // Predicated region
  $region6: #{lstm_module_forward.1} parent=0 // pred_check
    _
  $region7: #{lstm_module_forward.1} parent=0 // pred_check_branch
    %12 = sbr.rel (0) target = $region9
  $region8: #{lstm_module_forward.1} parent=0 // pred_region
    _
  $region9: #{lstm_module_forward.1} parent=0 // pred_fallthru
    _
  // Predicated region
  $region10: #{lstm_module_forward.1} parent=0 // pred_check
    _
  $region11: #{lstm_module_forward.1} parent=0 // pred_check_branch
    %14 = sbr.rel (0) target = $region13
  $region12: #{lstm_module_forward.1} parent=0 // pred_region
    _
  $region13: #{lstm_module_forward.1} parent=0 // pred_fallthru
    _
  // Predicated region
  $region14: #{lstm_module_forward.1} parent=0 // pred_check
    _
  $region15: #{lstm_module_forward.1} parent=0 // pred_check_branch
    %16 = sbr.rel (0) target = $region17
  $region16: #{lstm_module_forward.1} parent=0 // pred_region
    _
  $region17: #{lstm_module_forward.1} parent=0 // pred_fallthru
    _
  %v18 = vld [vmem:[%s0] sm:$0xf]
  %v19 = vld [vmem:[%s0 + $0x4] sm:$0xf]
  %v20 = vld [vmem:[%s0 + $0x8] sm:$0xf]
  %v21 = vld [vmem:[%s0 + $0xc] sm:$0xf]
  %v22 = vld [vmem:[%s0 + $0x10] sm:$0xf]
  %v23 = vld [vmem:[%s0 + $0x14] sm:$0xf]
  %v24 = vld [vmem:[%s0 + $0x18] sm:$0xf]
  %v25 = vld [vmem:[%s0 + $0x1c] sm:$0xf]
  %v26 = vld [vmem:[%s1] sm:$0xff]
  %v27 = vld [vmem:[%s1 + $0x8] sm:$0xff]
  %v28 = vld [vmem:[%s1 + $0x10] sm:$0xff]
  %v29 = vld [vmem:[%s1 + $0x18] sm:$0xff]
  %v30 = vld [vmem:[%s3] sm:$0x3]
  %v32 = vlaneseq
  %v33 = vshrl.u32 %v32, 7
  %v34 = vsub.s32 0, %v33
  %v35 = vrot.slane %v30, %v34
  %v36 = vlaneseq
  %v37 = vshrl.u32 %v36, 7
  %v38 = vsub.s32 1, %v37
  %v39 = vrot.slane %v30, %v38
  %v50 = vunpack.c.l.b16 %v18
  %v51 = vunpack.c.l.b16 %v19
  %v52 = vunpack.c.l.b16 %v20
  %v53 = vunpack.c.l.b16 %v21
  %v54 = vunpack.c.l.b16 %v22
  %v55 = vunpack.c.l.b16 %v23
  %v56 = vunpack.c.l.b16 %v24
  %v57 = vunpack.c.l.b16 %v25
  %v58 = vpack.c.b16 %v51, %v50
  %v59 = vpack.c.b16 %v53, %v52
  %v60 = vpack.c.b16 %v55, %v54
  %v61 = vpack.c.b16 %v57, %v56
  %v66 = vunpack.c.l.b16 %v26
  %v67 = vunpack.c.h.b16 %v26
  %v68 = vunpack.c.l.b16 %v27
  %v69 = vunpack.c.h.b16 %v27
  %v70 = vunpack.c.l.b16 %v28
  %v71 = vunpack.c.h.b16 %v28
  %v72 = vunpack.c.l.b16 %v29
  %v73 = vunpack.c.h.b16 %v29
  %v74 = vpack.c.b16 %v68, %v66
  %v75 = vpack.c.b16 %v69, %v67
  %v76 = vpack.c.b16 %v72, %v70
  %v77 = vpack.c.b16 %v73, %v71
  %vm82 = vcmask 261120
  %v84 = vsel %vm82, %v58, 0
  %v87 = vsel %vm82, %v59, 0
  %v90 = vsel %vm82, %v60, 0
  %v93 = vsel %vm82, %v61, 0
  %95 = vmatprep.subr.bf16.mxu0 %v75
  %96 = vmatpush1.bf16.msra.mxu0 %v74
  %97 = vmatprep.subr.bf16.mxu0 %v77
  %98 = vmatpush1.bf16.msra.mxu0 %v76
  %99 = vmatprep.subr.bf16.mxu0 0
  %100 = vmatpush1.bf16.msra.mxu0 0
  %101 = vmatprep.subr.bf16.mxu0 0
  %102 = vmatpush1.bf16.msra.mxu0 0
  %103 = vmatprep.subr.bf16.mxu0 0
  %104 = vmatpush1.bf16.msra.mxu0 0
  %105 = vmatprep.subr.bf16.mxu0 0
  %106 = vmatpush1.bf16.msra.mxu0 0
  %107 = vmatprep.subr.bf16.mxu0 0
  %108 = vmatpush1.bf16.msra.mxu0 0
  %109 = vmatprep.subr.bf16.mxu0 0
  %110 = vmatpush1.bf16.msra.mxu0 0
  %111 = vmatprep.subr.bf16.mxu0 0
  %112 = vmatpush1.bf16.msra.mxu0 0
  %113 = vmatprep.subr.bf16.mxu0 0
  %114 = vmatpush1.bf16.msra.mxu0 0
  %115 = vmatprep.subr.bf16.mxu0 0
  %116 = vmatpush1.bf16.msra.mxu0 0
  %117 = vmatprep.subr.bf16.mxu0 0
  %118 = vmatpush1.bf16.msra.mxu0 0
  %119 = vmatprep.subr.bf16.mxu0 0
  %120 = vmatpush1.bf16.msra.mxu0 0
  %121 = vmatprep.subr.bf16.mxu0 0
  %122 = vmatpush1.bf16.msra.mxu0 0
  %123 = vmatprep.subr.bf16.mxu0 0
  %124 = vmatpush1.bf16.msra.mxu0 0
  %125 = vmatprep.subr.bf16.mxu0 0
  %126 = vmatpush1.bf16.msra.mxu0 0
  %127 = vmatprep.mubr.bf16.mxu0 0
  %128 = vmatmul.mubr.bf16.gmra.mrb[0].mxu0 %v84
  %v129 = vpop.f32.mrb[0].mxu0
  %v130 = vadd.f32 %v35, %v129
  %v131 = vpop.f32.mrb[0].mxu0
  %v132 = vadd.f32 %v39, %v131
  %v133 = vpop.f32.mrb[0].mxu0
  %v134 = vadd.f32 %v35, %v133
  %v135 = vpop.f32.mrb[0].mxu0
  %v136 = vadd.f32 %v39, %v135
  %137 = vmatprep.mubr.bf16.mxu0 0
  %138 = vmatmul.mubr.bf16.gmra.mrb[0].mxu0 %v87
  %v139 = vpop.f32.mrb[0].mxu0
  %v140 = vadd.f32 %v35, %v139
  %v141 = vpop.f32.mrb[0].mxu0
  %v142 = vadd.f32 %v39, %v141
  %v143 = vpop.f32.mrb[0].mxu0
  %v144 = vadd.f32 %v35, %v143
  %v145 = vpop.f32.mrb[0].mxu0
  %v146 = vadd.f32 %v39, %v145
  %147 = vmatprep.mubr.bf16.mxu0 0
  %148 = vmatmul.mubr.bf16.gmra.mrb[0].mxu0 %v90
  %v149 = vpop.f32.mrb[0].mxu0
  %v150 = vadd.f32 %v35, %v149
  %v151 = vpop.f32.mrb[0].mxu0
  %v152 = vadd.f32 %v39, %v151
  %v153 = vpop.f32.mrb[0].mxu0
  %v154 = vadd.f32 %v35, %v153
  %v155 = vpop.f32.mrb[0].mxu0
  %v156 = vadd.f32 %v39, %v155
  %157 = vmatprep.mubr.bf16.mxu0 0
  %158 = vmatmul.mubr.bf16.gmra.mrb[0].mxu0 %v93
  %v159 = vpop.f32.mrb[0].mxu0
  %v160 = vadd.f32 %v35, %v159
  %v161 = vpop.f32.mrb[0].mxu0
  %v162 = vadd.f32 %v39, %v161
  %v163 = vpop.f32.mrb[0].mxu0
  %v164 = vadd.f32 %v35, %v163
  %v165 = vpop.f32.mrb[0].mxu0
  %v166 = vadd.f32 %v39, %v165
  %167 = vdwg.mxu0
  %v168 = vpack.c.bf16 %v130, %v130
  %v169 = vpack.c.bf16 %v132, %v132
  %v170 = vpack.c.bf16 %v134, %v134
  %v171 = vpack.c.bf16 %v136, %v136
  %v172 = vpack.c.bf16 %v140, %v140
  %v173 = vpack.c.bf16 %v142, %v142
  %v174 = vpack.c.bf16 %v144, %v144
  %v175 = vpack.c.bf16 %v146, %v146
  %v176 = vpack.c.bf16 %v150, %v150
  %v177 = vpack.c.bf16 %v152, %v152
  %v178 = vpack.c.bf16 %v154, %v154
  %v179 = vpack.c.bf16 %v156, %v156
  %v180 = vpack.c.bf16 %v160, %v160
  %v181 = vpack.c.bf16 %v162, %v162
  %v182 = vpack.c.bf16 %v164, %v164
  %v183 = vpack.c.bf16 %v166, %v166
  %v200 = vunpack.c.l.b16 %v168
  %v201 = vunpack.c.l.b16 %v169
  %v202 = vunpack.c.l.b16 %v170
  %v203 = vunpack.c.l.b16 %v171
  %v204 = vunpack.c.l.b16 %v172
  %v205 = vunpack.c.l.b16 %v173
  %v206 = vunpack.c.l.b16 %v174
  %v207 = vunpack.c.l.b16 %v175
  %v208 = vunpack.c.l.b16 %v176
  %v209 = vunpack.c.l.b16 %v177
  %v210 = vunpack.c.l.b16 %v178
  %v211 = vunpack.c.l.b16 %v179
  %v212 = vunpack.c.l.b16 %v180
  %v213 = vunpack.c.l.b16 %v181
  %v214 = vunpack.c.l.b16 %v182
  %v215 = vunpack.c.l.b16 %v183
  %v216 = vpack.c.b16 %v201, %v200
  %v217 = vpack.c.b16 %v203, %v202
  %v218 = vpack.c.b16 %v205, %v204
  %v219 = vpack.c.b16 %v207, %v206
  %v220 = vpack.c.b16 %v209, %v208
  %v221 = vpack.c.b16 %v211, %v210
  %v222 = vpack.c.b16 %v213, %v212
  %v223 = vpack.c.b16 %v215, %v214
  %232 = vst [vmem:[#allocation2] sm:$0xff] %v216
  %233 = vst [vmem:[#allocation2 + $0x8] sm:$0xff] %v217
  %234 = vst [vmem:[#allocation2 + $0x10] sm:$0xff] %v218
  %235 = vst [vmem:[#allocation2 + $0x18] sm:$0xff] %v219
  %236 = vst [vmem:[#allocation2 + $0x20] sm:$0xff] %v220
  %237 = vst [vmem:[#allocation2 + $0x28] sm:$0xff] %v221
  %238 = vst [vmem:[#allocation2 + $0x30] sm:$0xff] %v222
  %239 = vst [vmem:[#allocation2 + $0x38] sm:$0xff] %v223
  %v240 = vld [vmem:[%s2] sm:$0xff]
  %v241 = vld [vmem:[%s2 + $0x8] sm:$0xff]
  %v242 = vld [vmem:[%s2 + $0x10] sm:$0xff]
  %v243 = vld [vmem:[%s2 + $0x18] sm:$0xff]
  %v244 = vld [vmem:[%s2 + $0x20] sm:$0xff]
  %v245 = vld [vmem:[%s2 + $0x28] sm:$0xff]
  %v246 = vld [vmem:[%s2 + $0x30] sm:$0xff]
  %v247 = vld [vmem:[%s2 + $0x38] sm:$0xff]
  %v248 = vld [vmem:[#allocation2] sm:$0xff]
  %v249 = vunpack.c.l.bf16 %v248
  %v250 = vunpack.c.h.bf16 %v248
  %v259 = vunpack.c.l.b16 %v240
  %v260 = vunpack.c.h.b16 %v240
  %v261 = vunpack.c.l.b16 %v241
  %v262 = vunpack.c.h.b16 %v241
  %v263 = vunpack.c.l.b16 %v242
  %v264 = vunpack.c.h.b16 %v242
  %v265 = vunpack.c.l.b16 %v243
  %v266 = vunpack.c.h.b16 %v243
  %v267 = vunpack.c.l.b16 %v244
  %v268 = vunpack.c.h.b16 %v244
  %v269 = vunpack.c.l.b16 %v245
  %v270 = vunpack.c.h.b16 %v245
  %v271 = vunpack.c.l.b16 %v246
  %v272 = vunpack.c.h.b16 %v246
  %v273 = vunpack.c.l.b16 %v247
  %v274 = vunpack.c.h.b16 %v247
  %v275 = vpack.c.b16 %v261, %v259
  %v276 = vpack.c.b16 %v262, %v260
  %v277 = vpack.c.b16 %v265, %v263
  %v278 = vpack.c.b16 %v266, %v264
  %v279 = vpack.c.b16 %v269, %v267
  %v280 = vpack.c.b16 %v270, %v268
  %v281 = vpack.c.b16 %v273, %v271
  %v282 = vpack.c.b16 %v274, %v272
  %vm291 = vcmask 523264
  %v293 = vsel %vm291, 0, 0
  %295 = vmatprep.subr.bf16.mxu0 %v276
  %296 = vmatpush1.bf16.msra.mxu0 %v275
  %297 = vmatprep.subr.bf16.mxu0 %v278
  %298 = vmatpush1.bf16.msra.mxu0 %v277
  %299 = vmatprep.subr.bf16.mxu0 %v280
  %300 = vmatpush1.bf16.msra.mxu0 %v279
  %301 = vmatprep.subr.bf16.mxu0 %v282
  %302 = vmatpush1.bf16.msra.mxu0 %v281
  %303 = vmatprep.subr.bf16.mxu0 0
  %304 = vmatpush1.bf16.msra.mxu0 0
  %305 = vmatprep.subr.bf16.mxu0 0
  %306 = vmatpush1.bf16.msra.mxu0 0
  %307 = vmatprep.subr.bf16.mxu0 0
  %308 = vmatpush1.bf16.msra.mxu0 0
  %309 = vmatprep.subr.bf16.mxu0 0
  %310 = vmatpush1.bf16.msra.mxu0 0
  %311 = vmatprep.subr.bf16.mxu0 0
  %312 = vmatpush1.bf16.msra.mxu0 0
  %313 = vmatprep.subr.bf16.mxu0 0
  %314 = vmatpush1.bf16.msra.mxu0 0
  %315 = vmatprep.subr.bf16.mxu0 0
  %316 = vmatpush1.bf16.msra.mxu0 0
  %317 = vmatprep.subr.bf16.mxu0 0
  %318 = vmatpush1.bf16.msra.mxu0 0
  %319 = vmatprep.subr.bf16.mxu0 0
  %320 = vmatpush1.bf16.msra.mxu0 0
  %321 = vmatprep.subr.bf16.mxu0 0
  %322 = vmatpush1.bf16.msra.mxu0 0
  %323 = vmatprep.subr.bf16.mxu0 0
  %324 = vmatpush1.bf16.msra.mxu0 0
  %325 = vmatprep.subr.bf16.mxu0 0
  %326 = vmatpush1.bf16.msra.mxu0 0
  %327 = vmatprep.mubr.bf16.mxu0 0
  %328 = vmatmul.mubr.bf16.gmra.mrb[0].mxu0 %v293
  %v329 = vpop.f32.mrb[0].mxu0
  %v330 = vadd.f32 0.0, %v329
  %v331 = vpop.f32.mrb[0].mxu0
  %v332 = vadd.f32 0.0, %v331
  %v333 = vpop.f32.mrb[0].mxu0
  %v334 = vpop.f32.mrb[0].mxu0
  %335 = vdwg.mxu0
  %v336 = vadd.f32 %v249, %v330
  %v337 = vadd.f32 %v250, %v332
  %v338 = vmul.f32 %v336, 0.5
  %v339 = vmul.f32 %v337, 0.5
  %v340 = vtanh.pop %v338
  %v341 = vtanh.pop %v339
  %v342 = vmul.f32 %v340, 0.5
  %v343 = vmul.f32 %v341, 0.5
  %v344 = vadd.f32 %v342, 0.5
  %v345 = vadd.f32 %v343, 0.5
  %v346 = vtanh.pop %v337
  %v347 = vmul.f32 %v344, 0.0
  %349 = vrot.lane.b32.xlu0 %v346, 64
  %v350 = vpop.permute.xlu0 %349
  %v352 = vmul.f32 %v344, %v350
  %354 = vrot.lane.b32.xlu0 %v352, 64
  %v355 = vpop.permute.xlu0 %354
  %v357 = vadd.f32 %v347, %v355
  %v358 = vtanh.pop %v357
  %360 = vrot.lane.b32.xlu0 %v358, 64
  %v361 = vpop.permute.xlu0 %360
  %v363 = vmul.f32 %v345, %v361
  %364 = vst.msk [vmem:[%s4] sm:$0xff] %vm291, %v363
  %s365 = scalar_lea.vmem [#allocation2], 8
  %v366 = vld [vmem:[%s365] sm:$0xff]
  %v367 = vunpack.c.l.bf16 %v366
  %v368 = vunpack.c.h.bf16 %v366
  %v369 = vpack.c.bf16 %v363, %v363
  %v371 = vsel %vm291, %v369, 0
  %373 = vmatprep.subr.bf16.mxu0 %v276
  %374 = vmatpush1.bf16.msra.mxu0 %v275
  %375 = vmatprep.subr.bf16.mxu0 %v278
  %376 = vmatpush1.bf16.msra.mxu0 %v277
  %377 = vmatprep.subr.bf16.mxu0 %v280
  %378 = vmatpush1.bf16.msra.mxu0 %v279
  %379 = vmatprep.subr.bf16.mxu0 %v282
  %380 = vmatpush1.bf16.msra.mxu0 %v281
  %381 = vmatprep.subr.bf16.mxu0 0
  %382 = vmatpush1.bf16.msra.mxu0 0
  %383 = vmatprep.subr.bf16.mxu0 0
  %384 = vmatpush1.bf16.msra.mxu0 0
  %385 = vmatprep.subr.bf16.mxu0 0
  %386 = vmatpush1.bf16.msra.mxu0 0
  %387 = vmatprep.subr.bf16.mxu0 0
  %388 = vmatpush1.bf16.msra.mxu0 0
  %389 = vmatprep.subr.bf16.mxu0 0
  %390 = vmatpush1.bf16.msra.mxu0 0
  %391 = vmatprep.subr.bf16.mxu0 0
  %392 = vmatpush1.bf16.msra.mxu0 0
  %393 = vmatprep.subr.bf16.mxu0 0
  %394 = vmatpush1.bf16.msra.mxu0 0
  %395 = vmatprep.subr.bf16.mxu0 0
  %396 = vmatpush1.bf16.msra.mxu0 0
  %397 = vmatprep.subr.bf16.mxu0 0
  %398 = vmatpush1.bf16.msra.mxu0 0
  %399 = vmatprep.subr.bf16.mxu0 0
  %400 = vmatpush1.bf16.msra.mxu0 0
  %401 = vmatprep.subr.bf16.mxu0 0
  %402 = vmatpush1.bf16.msra.mxu0 0
  %403 = vmatprep.subr.bf16.mxu0 0
  %404 = vmatpush1.bf16.msra.mxu0 0
  %405 = vmatprep.mubr.bf16.mxu0 0
  %406 = vmatmul.mubr.bf16.gmra.mrb[0].mxu0 %v371
  %v407 = vpop.f32.mrb[0].mxu0
  %v408 = vadd.f32 0.0, %v407
  %v409 = vpop.f32.mrb[0].mxu0
  %v410 = vadd.f32 0.0, %v409
  %v411 = vpop.f32.mrb[0].mxu0
  %v412 = vpop.f32.mrb[0].mxu0
  %413 = vdwg.mxu0
  %v414 = vadd.f32 %v367, %v408
  %v415 = vadd.f32 %v368, %v410
  %v416 = vmul.f32 %v414, 0.5
  %v417 = vmul.f32 %v415, 0.5
  %v418 = vtanh.pop %v416
  %v419 = vtanh.pop %v417
  %v420 = vmul.f32 %v418, 0.5
  %v421 = vmul.f32 %v419, 0.5
  %v422 = vadd.f32 %v420, 0.5
  %v423 = vadd.f32 %v421, 0.5
  %v424 = vtanh.pop %v415
  %v425 = vmul.f32 %v422, %v357
  %427 = vrot.lane.b32.xlu0 %v424, 64
  %v428 = vpop.permute.xlu0 %427
  %v430 = vmul.f32 %v422, %v428
  %432 = vrot.lane.b32.xlu0 %v430, 64
  %v433 = vpop.permute.xlu0 %432
  %v435 = vadd.f32 %v425, %v433
  %v436 = vtanh.pop %v435
  %438 = vrot.lane.b32.xlu0 %v436, 64
  %v439 = vpop.permute.xlu0 %438
  %v441 = vmul.f32 %v423, %v439
  %s442 = scalar_lea.vmem %s4, 8
  %443 = vst.msk [vmem:[%s442] sm:$0xff] %vm291, %v441
  %s444 = scalar_lea.vmem [#allocation2], 16
  %v445 = vld [vmem:[%s444] sm:$0xff]
  %v446 = vunpack.c.l.bf16 %v445
  %v447 = vunpack.c.h.bf16 %v445
  %v448 = vpack.c.bf16 %v441, %v441
  %v450 = vsel %vm291, %v448, 0
  %452 = vmatprep.subr.bf16.mxu0 %v276
  %453 = vmatpush1.bf16.msra.mxu0 %v275
  %454 = vmatprep.subr.bf16.mxu0 %v278
  %455 = vmatpush1.bf16.msra.mxu0 %v277
  %456 = vmatprep.subr.bf16.mxu0 %v280
  %457 = vmatpush1.bf16.msra.mxu0 %v279
  %458 = vmatprep.subr.bf16.mxu0 %v282
  %459 = vmatpush1.bf16.msra.mxu0 %v281
  %460 = vmatprep.subr.bf16.mxu0 0
  %461 = vmatpush1.bf16.msra.mxu0 0
  %462 = vmatprep.subr.bf16.mxu0 0
  %463 = vmatpush1.bf16.msra.mxu0 0
  %464 = vmatprep.subr.bf16.mxu0 0
  %465 = vmatpush1.bf16.msra.mxu0 0
  %466 = vmatprep.subr.bf16.mxu0 0
  %467 = vmatpush1.bf16.msra.mxu0 0
  %468 = vmatprep.subr.bf16.mxu0 0
  %469 = vmatpush1.bf16.msra.mxu0 0
  %470 = vmatprep.subr.bf16.mxu0 0
  %471 = vmatpush1.bf16.msra.mxu0 0
  %472 = vmatprep.subr.bf16.mxu0 0
  %473 = vmatpush1.bf16.msra.mxu0 0
  %474 = vmatprep.subr.bf16.mxu0 0
  %475 = vmatpush1.bf16.msra.mxu0 0
  %476 = vmatprep.subr.bf16.mxu0 0
  %477 = vmatpush1.bf16.msra.mxu0 0
  %478 = vmatprep.subr.bf16.mxu0 0
  %479 = vmatpush1.bf16.msra.mxu0 0
  %480 = vmatprep.subr.bf16.mxu0 0
  %481 = vmatpush1.bf16.msra.mxu0 0
  %482 = vmatprep.subr.bf16.mxu0 0
  %483 = vmatpush1.bf16.msra.mxu0 0
  %484 = vmatprep.mubr.bf16.mxu0 0
  %485 = vmatmul.mubr.bf16.gmra.mrb[0].mxu0 %v450
  %v486 = vpop.f32.mrb[0].mxu0
  %v487 = vadd.f32 0.0, %v486
  %v488 = vpop.f32.mrb[0].mxu0
  %v489 = vadd.f32 0.0, %v488
  %v490 = vpop.f32.mrb[0].mxu0
  %v491 = vpop.f32.mrb[0].mxu0
  %492 = vdwg.mxu0
  %v493 = vadd.f32 %v446, %v487
  %v494 = vadd.f32 %v447, %v489
  %v495 = vmul.f32 %v493, 0.5
  %v496 = vmul.f32 %v494, 0.5
  %v497 = vtanh.pop %v495
  %v498 = vtanh.pop %v496
  %v499 = vmul.f32 %v497, 0.5
  %v500 = vmul.f32 %v498, 0.5
  %v501 = vadd.f32 %v499, 0.5
  %v502 = vadd.f32 %v500, 0.5
  %v503 = vtanh.pop %v494
  %v504 = vmul.f32 %v501, %v435
  %506 = vrot.lane.b32.xlu0 %v503, 64
  %v507 = vpop.permute.xlu0 %506
  %v509 = vmul.f32 %v501, %v507
  %511 = vrot.lane.b32.xlu0 %v509, 64
  %v512 = vpop.permute.xlu0 %511
  %v514 = vadd.f32 %v504, %v512
  %v515 = vtanh.pop %v514
  %517 = vrot.lane.b32.xlu0 %v515, 64
  %v518 = vpop.permute.xlu0 %517
  %v520 = vmul.f32 %v502, %v518
  %s521 = scalar_lea.vmem %s4, 16
  %522 = vst.msk [vmem:[%s521] sm:$0xff] %vm291, %v520
  %s523 = scalar_lea.vmem [#allocation2], 24
  %v524 = vld [vmem:[%s523] sm:$0xff]
  %v525 = vunpack.c.l.bf16 %v524
  %v526 = vunpack.c.h.bf16 %v524
  %v527 = vpack.c.bf16 %v520, %v520
  %v529 = vsel %vm291, %v527, 0
  %531 = vmatprep.subr.bf16.mxu0 %v276
  %532 = vmatpush1.bf16.msra.mxu0 %v275
  %533 = vmatprep.subr.bf16.mxu0 %v278
  %534 = vmatpush1.bf16.msra.mxu0 %v277
  %535 = vmatprep.subr.bf16.mxu0 %v280
  %536 = vmatpush1.bf16.msra.mxu0 %v279
  %537 = vmatprep.subr.bf16.mxu0 %v282
  %538 = vmatpush1.bf16.msra.mxu0 %v281
  %539 = vmatprep.subr.bf16.mxu0 0
  %540 = vmatpush1.bf16.msra.mxu0 0
  %541 = vmatprep.subr.bf16.mxu0 0
  %542 = vmatpush1.bf16.msra.mxu0 0
  %543 = vmatprep.subr.bf16.mxu0 0
  %544 = vmatpush1.bf16.msra.mxu0 0
  %545 = vmatprep.subr.bf16.mxu0 0
  %546 = vmatpush1.bf16.msra.mxu0 0
  %547 = vmatprep.subr.bf16.mxu0 0
  %548 = vmatpush1.bf16.msra.mxu0 0
  %549 = vmatprep.subr.bf16.mxu0 0
  %550 = vmatpush1.bf16.msra.mxu0 0
  %551 = vmatprep.subr.bf16.mxu0 0
  %552 = vmatpush1.bf16.msra.mxu0 0
  %553 = vmatprep.subr.bf16.mxu0 0
  %554 = vmatpush1.bf16.msra.mxu0 0
  %555 = vmatprep.subr.bf16.mxu0 0
  %556 = vmatpush1.bf16.msra.mxu0 0
  %557 = vmatprep.subr.bf16.mxu0 0
  %558 = vmatpush1.bf16.msra.mxu0 0
  %559 = vmatprep.subr.bf16.mxu0 0
  %560 = vmatpush1.bf16.msra.mxu0 0
  %561 = vmatprep.subr.bf16.mxu0 0
  %562 = vmatpush1.bf16.msra.mxu0 0
  %563 = vmatprep.mubr.bf16.mxu0 0
  %564 = vmatmul.mubr.bf16.gmra.mrb[0].mxu0 %v529
  %v565 = vpop.f32.mrb[0].mxu0
  %v566 = vadd.f32 0.0, %v565
  %v567 = vpop.f32.mrb[0].mxu0
  %v568 = vadd.f32 0.0, %v567
  %v569 = vpop.f32.mrb[0].mxu0
  %v570 = vpop.f32.mrb[0].mxu0
  %571 = vdwg.mxu0
  %v572 = vadd.f32 %v525, %v566
  %v573 = vadd.f32 %v526, %v568
  %v574 = vmul.f32 %v572, 0.5
  %v575 = vmul.f32 %v573, 0.5
  %v576 = vtanh.pop %v574
  %v577 = vtanh.pop %v575
  %v578 = vmul.f32 %v576, 0.5
  %v579 = vmul.f32 %v577, 0.5
  %v580 = vadd.f32 %v578, 0.5
  %v581 = vadd.f32 %v579, 0.5
  %v582 = vtanh.pop %v573
  %v583 = vmul.f32 %v580, %v514
  %585 = vrot.lane.b32.xlu0 %v582, 64
  %v586 = vpop.permute.xlu0 %585
  %v588 = vmul.f32 %v580, %v586
  %590 = vrot.lane.b32.xlu0 %v588, 64
  %v591 = vpop.permute.xlu0 %590
  %v593 = vadd.f32 %v583, %v591
  %v594 = vtanh.pop %v593
  %596 = vrot.lane.b32.xlu0 %v594, 64
  %v597 = vpop.permute.xlu0 %596
  %v599 = vmul.f32 %v581, %v597
  %s600 = scalar_lea.vmem %s4, 24
  %601 = vst.msk [vmem:[%s600] sm:$0xff] %vm291, %v599
  %s602 = scalar_lea.vmem [#allocation2], 32
  %v603 = vld [vmem:[%s602] sm:$0xff]
  %v604 = vunpack.c.l.bf16 %v603
  %v605 = vunpack.c.h.bf16 %v603
  %v606 = vpack.c.bf16 %v599, %v599
  %v608 = vsel %vm291, %v606, 0
  %610 = vmatprep.subr.bf16.mxu0 %v276
  %611 = vmatpush1.bf16.msra.mxu0 %v275
  %612 = vmatprep.subr.bf16.mxu0 %v278
  %613 = vmatpush1.bf16.msra.mxu0 %v277
  %614 = vmatprep.subr.bf16.mxu0 %v280
  %615 = vmatpush1.bf16.msra.mxu0 %v279
  %616 = vmatprep.subr.bf16.mxu0 %v282
  %617 = vmatpush1.bf16.msra.mxu0 %v281
  %618 = vmatprep.subr.bf16.mxu0 0
  %619 = vmatpush1.bf16.msra.mxu0 0
  %620 = vmatprep.subr.bf16.mxu0 0
  %621 = vmatpush1.bf16.msra.mxu0 0
  %622 = vmatprep.subr.bf16.mxu0 0
  %623 = vmatpush1.bf16.msra.mxu0 0
  %624 = vmatprep.subr.bf16.mxu0 0
  %625 = vmatpush1.bf16.msra.mxu0 0
  %626 = vmatprep.subr.bf16.mxu0 0
  %627 = vmatpush1.bf16.msra.mxu0 0
  %628 = vmatprep.subr.bf16.mxu0 0
  %629 = vmatpush1.bf16.msra.mxu0 0
  %630 = vmatprep.subr.bf16.mxu0 0
  %631 = vmatpush1.bf16.msra.mxu0 0
  %632 = vmatprep.subr.bf16.mxu0 0
  %633 = vmatpush1.bf16.msra.mxu0 0
  %634 = vmatprep.subr.bf16.mxu0 0
  %635 = vmatpush1.bf16.msra.mxu0 0
  %636 = vmatprep.subr.bf16.mxu0 0
  %637 = vmatpush1.bf16.msra.mxu0 0
  %638 = vmatprep.subr.bf16.mxu0 0
  %639 = vmatpush1.bf16.msra.mxu0 0
  %640 = vmatprep.subr.bf16.mxu0 0
  %641 = vmatpush1.bf16.msra.mxu0 0
  %642 = vmatprep.mubr.bf16.mxu0 0
  %643 = vmatmul.mubr.bf16.gmra.mrb[0].mxu0 %v608
  %v644 = vpop.f32.mrb[0].mxu0
  %v645 = vadd.f32 0.0, %v644
  %v646 = vpop.f32.mrb[0].mxu0
  %v647 = vadd.f32 0.0, %v646
  %v648 = vpop.f32.mrb[0].mxu0
  %v649 = vpop.f32.mrb[0].mxu0
  %650 = vdwg.mxu0
  %v651 = vadd.f32 %v604, %v645
  %v652 = vadd.f32 %v605, %v647
  %v653 = vmul.f32 %v651, 0.5
  %v654 = vmul.f32 %v652, 0.5
  %v655 = vtanh.pop %v653
  %v656 = vtanh.pop %v654
  %v657 = vmul.f32 %v655, 0.5
  %v658 = vmul.f32 %v656, 0.5
  %v659 = vadd.f32 %v657, 0.5
  %v660 = vadd.f32 %v658, 0.5
  %v661 = vtanh.pop %v652
  %v662 = vmul.f32 %v659, %v593
  %664 = vrot.lane.b32.xlu0 %v661, 64
  %v665 = vpop.permute.xlu0 %664
  %v667 = vmul.f32 %v659, %v665
  %669 = vrot.lane.b32.xlu0 %v667, 64
  %v670 = vpop.permute.xlu0 %669
  %v672 = vadd.f32 %v662, %v670
  %v673 = vtanh.pop %v672
  %675 = vrot.lane.b32.xlu0 %v673, 64
  %v676 = vpop.permute.xlu0 %675
  %v678 = vmul.f32 %v660, %v676
  %s679 = scalar_lea.vmem %s4, 32
  %680 = vst.msk [vmem:[%s679] sm:$0xff] %vm291, %v678
  %s681 = scalar_lea.vmem [#allocation2], 40
  %v682 = vld [vmem:[%s681] sm:$0xff]
  %v683 = vunpack.c.l.bf16 %v682
  %v684 = vunpack.c.h.bf16 %v682
  %v685 = vpack.c.bf16 %v678, %v678
  %v687 = vsel %vm291, %v685, 0
  %689 = vmatprep.subr.bf16.mxu0 %v276
  %690 = vmatpush1.bf16.msra.mxu0 %v275
  %691 = vmatprep.subr.bf16.mxu0 %v278
  %692 = vmatpush1.bf16.msra.mxu0 %v277
  %693 = vmatprep.subr.bf16.mxu0 %v280
  %694 = vmatpush1.bf16.msra.mxu0 %v279
  %695 = vmatprep.subr.bf16.mxu0 %v282
  %696 = vmatpush1.bf16.msra.mxu0 %v281
  %697 = vmatprep.subr.bf16.mxu0 0
  %698 = vmatpush1.bf16.msra.mxu0 0
  %699 = vmatprep.subr.bf16.mxu0 0
  %700 = vmatpush1.bf16.msra.mxu0 0
  %701 = vmatprep.subr.bf16.mxu0 0
  %702 = vmatpush1.bf16.msra.mxu0 0
  %703 = vmatprep.subr.bf16.mxu0 0
  %704 = vmatpush1.bf16.msra.mxu0 0
  %705 = vmatprep.subr.bf16.mxu0 0
  %706 = vmatpush1.bf16.msra.mxu0 0
  %707 = vmatprep.subr.bf16.mxu0 0
  %708 = vmatpush1.bf16.msra.mxu0 0
  %709 = vmatprep.subr.bf16.mxu0 0
  %710 = vmatpush1.bf16.msra.mxu0 0
  %711 = vmatprep.subr.bf16.mxu0 0
  %712 = vmatpush1.bf16.msra.mxu0 0
  %713 = vmatprep.subr.bf16.mxu0 0
  %714 = vmatpush1.bf16.msra.mxu0 0
  %715 = vmatprep.subr.bf16.mxu0 0
  %716 = vmatpush1.bf16.msra.mxu0 0
  %717 = vmatprep.subr.bf16.mxu0 0
  %718 = vmatpush1.bf16.msra.mxu0 0
  %719 = vmatprep.subr.bf16.mxu0 0
  %720 = vmatpush1.bf16.msra.mxu0 0
  %721 = vmatprep.mubr.bf16.mxu0 0
  %722 = vmatmul.mubr.bf16.gmra.mrb[0].mxu0 %v687
  %v723 = vpop.f32.mrb[0].mxu0
  %v724 = vadd.f32 0.0, %v723
  %v725 = vpop.f32.mrb[0].mxu0
  %v726 = vadd.f32 0.0, %v725
  %v727 = vpop.f32.mrb[0].mxu0
  %v728 = vpop.f32.mrb[0].mxu0
  %729 = vdwg.mxu0
  %v730 = vadd.f32 %v683, %v724
  %v731 = vadd.f32 %v684, %v726
  %v732 = vmul.f32 %v730, 0.5
  %v733 = vmul.f32 %v731, 0.5
  %v734 = vtanh.pop %v732
  %v735 = vtanh.pop %v733
  %v736 = vmul.f32 %v734, 0.5
  %v737 = vmul.f32 %v735, 0.5
  %v738 = vadd.f32 %v736, 0.5
  %v739 = vadd.f32 %v737, 0.5
  %v740 = vtanh.pop %v731
  %v741 = vmul.f32 %v738, %v672
  %743 = vrot.lane.b32.xlu0 %v740, 64
  %v744 = vpop.permute.xlu0 %743
  %v746 = vmul.f32 %v738, %v744
  %748 = vrot.lane.b32.xlu0 %v746, 64
  %v749 = vpop.permute.xlu0 %748
  %v751 = vadd.f32 %v741, %v749
  %v752 = vtanh.pop %v751
  %754 = vrot.lane.b32.xlu0 %v752, 64
  %v755 = vpop.permute.xlu0 %754
  %v757 = vmul.f32 %v739, %v755
  %s758 = scalar_lea.vmem %s4, 40
  %759 = vst.msk [vmem:[%s758] sm:$0xff] %vm291, %v757
  %s760 = scalar_lea.vmem [#allocation2], 48
  %v761 = vld [vmem:[%s760] sm:$0xff]
  %v762 = vunpack.c.l.bf16 %v761
  %v763 = vunpack.c.h.bf16 %v761
  %v764 = vpack.c.bf16 %v757, %v757
  %v766 = vsel %vm291, %v764, 0
  %768 = vmatprep.subr.bf16.mxu0 %v276
  %769 = vmatpush1.bf16.msra.mxu0 %v275
  %770 = vmatprep.subr.bf16.mxu0 %v278
  %771 = vmatpush1.bf16.msra.mxu0 %v277
  %772 = vmatprep.subr.bf16.mxu0 %v280
  %773 = vmatpush1.bf16.msra.mxu0 %v279
  %774 = vmatprep.subr.bf16.mxu0 %v282
  %775 = vmatpush1.bf16.msra.mxu0 %v281
  %776 = vmatprep.subr.bf16.mxu0 0
  %777 = vmatpush1.bf16.msra.mxu0 0
  %778 = vmatprep.subr.bf16.mxu0 0
  %779 = vmatpush1.bf16.msra.mxu0 0
  %780 = vmatprep.subr.bf16.mxu0 0
  %781 = vmatpush1.bf16.msra.mxu0 0
  %782 = vmatprep.subr.bf16.mxu0 0
  %783 = vmatpush1.bf16.msra.mxu0 0
  %784 = vmatprep.subr.bf16.mxu0 0
  %785 = vmatpush1.bf16.msra.mxu0 0
  %786 = vmatprep.subr.bf16.mxu0 0
  %787 = vmatpush1.bf16.msra.mxu0 0
  %788 = vmatprep.subr.bf16.mxu0 0
  %789 = vmatpush1.bf16.msra.mxu0 0
  %790 = vmatprep.subr.bf16.mxu0 0
  %791 = vmatpush1.bf16.msra.mxu0 0
  %792 = vmatprep.subr.bf16.mxu0 0
  %793 = vmatpush1.bf16.msra.mxu0 0
  %794 = vmatprep.subr.bf16.mxu0 0
  %795 = vmatpush1.bf16.msra.mxu0 0
  %796 = vmatprep.subr.bf16.mxu0 0
  %797 = vmatpush1.bf16.msra.mxu0 0
  %798 = vmatprep.subr.bf16.mxu0 0
  %799 = vmatpush1.bf16.msra.mxu0 0
  %800 = vmatprep.mubr.bf16.mxu0 0
  %801 = vmatmul.mubr.bf16.gmra.mrb[0].mxu0 %v766
  %v802 = vpop.f32.mrb[0].mxu0
  %v803 = vadd.f32 0.0, %v802
  %v804 = vpop.f32.mrb[0].mxu0
  %v805 = vadd.f32 0.0, %v804
  %v806 = vpop.f32.mrb[0].mxu0
  %v807 = vpop.f32.mrb[0].mxu0
  %808 = vdwg.mxu0
  %v809 = vadd.f32 %v762, %v803
  %v810 = vadd.f32 %v763, %v805
  %v811 = vmul.f32 %v809, 0.5
  %v812 = vmul.f32 %v810, 0.5
  %v813 = vtanh.pop %v811
  %v814 = vtanh.pop %v812
  %v815 = vmul.f32 %v813, 0.5
  %v816 = vmul.f32 %v814, 0.5
  %v817 = vadd.f32 %v815, 0.5
  %v818 = vadd.f32 %v816, 0.5
  %v819 = vtanh.pop %v810
  %v820 = vmul.f32 %v817, %v751
  %822 = vrot.lane.b32.xlu0 %v819, 64
  %v823 = vpop.permute.xlu0 %822
  %v825 = vmul.f32 %v817, %v823
  %827 = vrot.lane.b32.xlu0 %v825, 64
  %v828 = vpop.permute.xlu0 %827
  %v830 = vadd.f32 %v820, %v828
  %v831 = vtanh.pop %v830
  %833 = vrot.lane.b32.xlu0 %v831, 64
  %v834 = vpop.permute.xlu0 %833
  %v836 = vmul.f32 %v818, %v834
  %s837 = scalar_lea.vmem %s4, 48
  %838 = vst.msk [vmem:[%s837] sm:$0xff] %vm291, %v836
  %s839 = scalar_lea.vmem [#allocation2], 56
  %v840 = vld [vmem:[%s839] sm:$0xff]
  %v841 = vunpack.c.l.bf16 %v840
  %v842 = vunpack.c.h.bf16 %v840
  %v843 = vpack.c.bf16 %v836, %v836
  %v845 = vsel %vm291, %v843, 0
  %847 = vmatprep.subr.bf16.mxu0 %v276
  %848 = vmatpush1.bf16.msra.mxu0 %v275
  %849 = vmatprep.subr.bf16.mxu0 %v278
  %850 = vmatpush1.bf16.msra.mxu0 %v277
  %851 = vmatprep.subr.bf16.mxu0 %v280
  %852 = vmatpush1.bf16.msra.mxu0 %v279
  %853 = vmatprep.subr.bf16.mxu0 %v282
  %854 = vmatpush1.bf16.msra.mxu0 %v281
  %855 = vmatprep.subr.bf16.mxu0 0
  %856 = vmatpush1.bf16.msra.mxu0 0
  %857 = vmatprep.subr.bf16.mxu0 0
  %858 = vmatpush1.bf16.msra.mxu0 0
  %859 = vmatprep.subr.bf16.mxu0 0
  %860 = vmatpush1.bf16.msra.mxu0 0
  %861 = vmatprep.subr.bf16.mxu0 0
  %862 = vmatpush1.bf16.msra.mxu0 0
  %863 = vmatprep.subr.bf16.mxu0 0
  %864 = vmatpush1.bf16.msra.mxu0 0
  %865 = vmatprep.subr.bf16.mxu0 0
  %866 = vmatpush1.bf16.msra.mxu0 0
  %867 = vmatprep.subr.bf16.mxu0 0
  %868 = vmatpush1.bf16.msra.mxu0 0
  %869 = vmatprep.subr.bf16.mxu0 0
  %870 = vmatpush1.bf16.msra.mxu0 0
  %871 = vmatprep.subr.bf16.mxu0 0
  %872 = vmatpush1.bf16.msra.mxu0 0
  %873 = vmatprep.subr.bf16.mxu0 0
  %874 = vmatpush1.bf16.msra.mxu0 0
  %875 = vmatprep.subr.bf16.mxu0 0
  %876 = vmatpush1.bf16.msra.mxu0 0
  %877 = vmatprep.subr.bf16.mxu0 0
  %878 = vmatpush1.bf16.msra.mxu0 0
  %879 = vmatprep.mubr.bf16.mxu0 0
  %880 = vmatmul.mubr.bf16.gmra.mrb[0].mxu0 %v845
  %v881 = vpop.f32.mrb[0].mxu0
  %v882 = vadd.f32 0.0, %v881
  %v883 = vpop.f32.mrb[0].mxu0
  %v884 = vadd.f32 0.0, %v883
  %v885 = vpop.f32.mrb[0].mxu0
  %v886 = vpop.f32.mrb[0].mxu0
  %887 = vdwg.mxu0
  %v888 = vadd.f32 %v841, %v882
  %v889 = vadd.f32 %v842, %v884
  %v890 = vmul.f32 %v888, 0.5
  %v891 = vmul.f32 %v889, 0.5
  %v892 = vtanh.pop %v890
  %v893 = vtanh.pop %v891
  %v894 = vmul.f32 %v892, 0.5
  %v895 = vmul.f32 %v893, 0.5
  %v896 = vadd.f32 %v894, 0.5
  %v897 = vadd.f32 %v895, 0.5
  %v898 = vtanh.pop %v889
  %v899 = vmul.f32 %v896, %v830
  %901 = vrot.lane.b32.xlu0 %v898, 64
  %v902 = vpop.permute.xlu0 %901
  %v904 = vmul.f32 %v896, %v902
  %906 = vrot.lane.b32.xlu0 %v904, 64
  %v907 = vpop.permute.xlu0 %906
  %v909 = vadd.f32 %v899, %v907
  %v910 = vtanh.pop %v909
  %912 = vrot.lane.b32.xlu0 %v910, 64
  %v913 = vpop.permute.xlu0 %912
  %v915 = vmul.f32 %v897, %v913
  %s916 = scalar_lea.vmem %s4, 56
  %917 = vst.msk [vmem:[%s916] sm:$0xff] %vm291, %v915
  // Predicated region
  $region18: #{lstm_module_forward.1} parent=0 // pred_check
    _
  $region19: #{lstm_module_forward.1} parent=0 // pred_check_branch
    %919 = sbr.rel (0) target = $region21
  $region20: #{lstm_module_forward.1} parent=0 // pred_region
    _
  $region21: #{lstm_module_forward.1} parent=0 // pred_fallthru
    _
  // Predicated region
  $region22: #{lstm_module_forward.1} parent=0 // pred_check
    _
  $region23: #{lstm_module_forward.1} parent=0 // pred_check_branch
    %921 = sbr.rel (0) target = $region25
  $region24: #{lstm_module_forward.1} parent=0 // pred_region
    _
  $region25: #{lstm_module_forward.1} parent=0 // pred_fallthru
    _

</llo_original>
